<compile_context>
chip_gen: v7x
topology: tpu7x:2x2x1
jax: 0.10.0
libtpu: 0.0.40
codegen_flags: <defaults>
</compile_context>

<pallas_src>
import math
import functools

import jax
import jax.numpy as jnp
from jax.experimental import pallas as pl
from jax.experimental.pallas import tpu as pltpu


# ---------------------------------------------------------------------------
# Kernel 1: fused QKV projection
# ---------------------------------------------------------------------------
def _qkv_proj_kernel(x_ref, w_ref, b_ref, o_ref):
    # x_ref: (1, TS, D)   w_ref: (D, 3*H*dh)   b_ref: (1, 3*H*dh)
    x = x_ref[0]
    o_ref[0] = (jnp.dot(x, w_ref[...], preferred_element_type=jnp.float32)
                + b_ref[...]).astype(o_ref.dtype)


# ---------------------------------------------------------------------------
# Kernel 2: batched-head attention + output projection
# ---------------------------------------------------------------------------
def _attn_out_kernel(q_ref, k_ref, v_ref, m_ref, wo_ref, bo_ref, o_ref, *, scale):
    # q_ref: (1, H, TQ, dh)   k_ref/v_ref: (1, H, S, dh)
    # m_ref: (1, TQ, S) int8 (1 = attend)   wo_ref: (H, dh, D)   bo_ref: (1, D)
    q = q_ref[0] * scale                        # fold 1/sqrt(d_model) into Q
    k = k_ref[0]
    v = v_ref[0]

    # One additive mask bias, computed once and shared by every head:
    # 0.0 where attend, -1e9 where masked.
    mask_bias = (m_ref[0].astype(jnp.float32) - 1.0) * 1e9          # (TQ, S)

    # Batched (leading head dim) attention -- a single MXU stream, no
    # per-head slicing / concat copies.
    s = jnp.einsum('hqd,hkd->hqk', q, k,
                   preferred_element_type=jnp.float32)              # (H, TQ, S)
    s = s + mask_bias[None, :, :]
    s_max = jnp.max(s, axis=-1, keepdims=True)
    e = jnp.exp(s - s_max)                                          # f32
    denom = jnp.sum(e, axis=-1, keepdims=True)                      # (H, TQ, 1)

    ctx = jnp.einsum('hqk,hkd->hqd', e.astype(v.dtype), v,
                     preferred_element_type=jnp.float32)            # (H, TQ, dh)
    # Normalize after the PV matmul (S/dh x fewer elements) on the EUP slot.
    ctx = ctx * pl.reciprocal(denom, approx=True)

    # Output projection: batched per-head matmul then reduce over heads
    # == concat(heads, -1) @ Wo.
    out_h = jnp.einsum('hqd,hdf->hqf', ctx.astype(wo_ref.dtype), wo_ref[...],
                       preferred_element_type=jnp.float32)          # (H, TQ, D)
    out = jnp.sum(out_h, axis=0) + bo_ref[...]                      # (TQ, D)
    o_ref[0] = out.astype(o_ref.dtype)


def _pick_tile(n, target):
    """Largest multiple of 8 <= target that divides n (else n itself)."""
    if n <= target:
        return n
    t = (target // 8) * 8
    while t >= 8:
        if n % t == 0:
            return t
        t -= 8
    return n


# ---------------------------------------------------------------------------
# Wrapper
# ---------------------------------------------------------------------------
def multi_head_attention(x, mask, params, *, n_heads,
                         compute_dtype=jnp.float32, q_tile=256, s_tile=512):
    """x: (B, S, D) float32, mask: (B, S, S) bool (True = attend)."""
    B, S, D = x.shape
    dh = D // n_heads
    Dp = n_heads * dh
    cd = compute_dtype   # set to jnp.bfloat16 on v6e/v7x for ~2x MXU rate

    # Fused QKV weights / biases.
    w_qkv = jnp.concatenate(
        [params["wq"], params["wk"], params["wv"]], axis=1).astype(cd)   # (D, 3*Dp)
    b_qkv = jnp.concatenate(
        [params["bq"], params["bk"], params["bv"]], axis=1).astype(jnp.float32)
    wo3 = params["wo"].reshape(n_heads, dh, D).astype(cd)                # (H, dh, D)
    bo = params["bo"].astype(jnp.float32)                                # (1, D)

    # ---- Kernel 1: fused QKV projection, grid over (batch, seq tile) ----
    TS = _pick_tile(S, s_tile)
    qkv = pl.pallas_call(
        _qkv_proj_kernel,
        out_shape=jax.ShapeDtypeStruct((B, S, 3 * Dp), cd),
        grid_spec=pltpu.PrefetchScalarGridSpec(
            num_scalar_prefetch=0,
            grid=(B, S // TS),
            in_specs=[
                pl.BlockSpec((1, TS, D), lambda b, si: (b, si, 0)),     # x
                pl.BlockSpec((D, 3 * Dp), lambda b, si: (0, 0)),        # W_qkv
                pl.BlockSpec((1, 3 * Dp), lambda b, si: (0, 0)),        # b_qkv
            ],
            out_specs=pl.BlockSpec((1, TS, 3 * Dp), lambda b, si: (b, si, 0)),
        ),
        compiler_params=pltpu.CompilerParams(
            dimension_semantics=("parallel", "parallel")),
    )(x.astype(cd), w_qkv, b_qkv)

    # Layout plumbing (outside the kernel): split heads, put head dim leading.
    qkv = qkv.reshape(B, S, 3, n_heads, dh)
    qkv = jnp.transpose(qkv, (2, 0, 3, 1, 4))            # (3, B, H, S, dh)
    q, k, v = qkv[0], qkv[1], qkv[2]

    # int8 mask: 4x less HBM traffic / VMEM than the previous f32 mask.
    mask_i8 = mask.astype(jnp.int8)

    # ---- Kernel 2: attention + output projection, grid over (batch, q tile) ----
    TQ = _pick_tile(S, q_tile)
    kernel = functools.partial(_attn_out_kernel, scale=1.0 / math.sqrt(D))
    return pl.pallas_call(
        kernel,
        out_shape=jax.ShapeDtypeStruct((B, S, D), x.dtype),
        grid_spec=pltpu.PrefetchScalarGridSpec(
            num_scalar_prefetch=0,
            grid=(B, S // TQ),
            in_specs=[
                pl.BlockSpec((1, n_heads, TQ, dh), lambda b, qi: (b, 0, qi, 0)),  # Q tile
                pl.BlockSpec((1, n_heads, S, dh), lambda b, qi: (b, 0, 0, 0)),    # K full
                pl.BlockSpec((1, n_heads, S, dh), lambda b, qi: (b, 0, 0, 0)),    # V full
                pl.BlockSpec((1, TQ, S), lambda b, qi: (b, qi, 0)),               # mask tile
                pl.BlockSpec((n_heads, dh, D), lambda b, qi: (0, 0, 0)),          # Wo
                pl.BlockSpec((1, D), lambda b, qi: (0, 0)),                       # bo
            ],
            out_specs=pl.BlockSpec((1, TQ, D), lambda b, qi: (b, qi, 0)),
        ),
        compiler_params=pltpu.CompilerParams(
            dimension_semantics=("parallel", "parallel")),
    )(q, k, v, mask_i8, wo3, bo)


# ---------------------------------------------------------------------------
# Pure-JAX reference mirroring the PyTorch forward
# ---------------------------------------------------------------------------
def _reference(x, mask, params, *, n_heads):
    B, S, D = x.shape
    d_hid = D // n_heads
    q = x @ params["wq"] + params["bq"][0]
    k = x @ params["wk"] + params["bk"][0]
    v = x @ params["wv"] + params["bv"][0]
    outs = []
    for h in range(n_heads):
        sl = slice(h * d_hid, (h + 1) * d_hid)
        qk = jnp.einsum("bqd,bkd->bqk", q[..., sl], k[..., sl]) / math.sqrt(D)
        qk = jnp.where(mask, qk, -1e9)
        p = jax.nn.softmax(qk, axis=-1)
        outs.append(jnp.einsum("bqk,bkd->bqd", p, v[..., sl]))
    cat = jnp.concatenate(outs, axis=-1)
    return cat @ params["wo"] + params["bo"][0]


def _init_params(key, d_model, n_heads):
    d_hid = d_model // n_heads
    keys = jax.random.split(key, 8)

    def u(k, shape, fan_in):
        bound = 1.0 / math.sqrt(fan_in)
        return jax.random.uniform(k, shape, jnp.float32, -bound, bound)

    return {
        "wq": u(keys[0], (d_model, n_heads * d_hid), d_model),
        "bq": u(keys[1], (1, n_heads * d_hid), d_model),
        "wk": u(keys[2], (d_model, n_heads * d_hid), d_model),
        "bk": u(keys[3], (1, n_heads * d_hid), d_model),
        "wv": u(keys[4], (d_model, n_heads * d_hid), d_model),
        "bv": u(keys[5], (1, n_heads * d_hid), d_model),
        "wo": u(keys[6], (n_heads * d_hid, d_model), n_heads * d_hid),
        "bo": u(keys[7], (1, d_model), n_heads * d_hid),
    }


if __name__ == "__main__":
    B, S, D = 2, 8, 32
    n_heads = 4

    key = jax.random.PRNGKey(0)
    kx, kmask, kparams = jax.random.split(key, 3)

    x = jax.random.normal(kx, (B, S, D), dtype=jnp.float32)
    # boolean mask (B, S, S): True = attend, False = masked out
    mask = jax.random.uniform(kmask, (B, S, S)) > 0.2
    # guarantee each row has at least one True so softmax is well defined
    mask = mask.at[:, :, 0].set(True)

    params = _init_params(kparams, D, n_heads)

    out = multi_head_attention(x, mask, params, n_heads=n_heads)
    out = jax.block_until_ready(out)

    ref = _reference(x, mask, params, n_heads=n_heads)
    assert out.shape == (B, S, D)
    # Tolerance covers the EUP approximate reciprocal used for the softmax
    # normalization; all other math runs in f32.
    assert jnp.allclose(out, ref, atol=2e-2, rtol=2e-2), \
        float(jnp.max(jnp.abs(out - ref)))

    print("KERNEL_OK")
</pallas_src>

<mosaic_0001>
module attributes {stable_mosaic.version = 11 : i64} {
  func.func @_qkv_proj_kernel(%arg0: i32, %arg1: i32, %arg2: memref<1x8x32xf32, #tpu.memory_space<vmem>>, %arg3: memref<32x96xf32, #tpu.memory_space<vmem>>, %arg4: memref<1x96xf32, #tpu.memory_space<vmem>>, %arg5: memref<1x8x96xf32, #tpu.memory_space<vmem>>) attributes {dimension_semantics = [#tpu.dimension_semantics<parallel>, #tpu.dimension_semantics<parallel>], iteration_bounds = array<i64: 2, 1>, scalar_prefetch = 0 : i64, scratch_operands = 0 : i64, tpu.core_type = #tpu.core_type<tc>, window_params = [{transform_indices = @transform_0, window_bounds = array<i64: 1, 8, 32>}, {pipeline_mode = #tpu.pipeline_mode<synchronous>, transform_indices = @transform_1, window_bounds = array<i64: 32, 96>}, {pipeline_mode = #tpu.pipeline_mode<synchronous>, transform_indices = @transform_2, window_bounds = array<i64: 1, 96>}, {transform_indices = @transform_3, window_bounds = array<i64: 1, 8, 96>}]} {
    %c0 = arith.constant 0 : index
    %c0_0 = arith.constant 0 : index
    %c0_1 = arith.constant 0 : index
    %0 = vector.load %arg2[%c0, %c0_0, %c0_1] : memref<1x8x32xf32, #tpu.memory_space<vmem>>, vector<1x8x32xf32>
    %1 = vector.shape_cast %0 : vector<1x8x32xf32> to vector<8x32xf32>
    %c0_2 = arith.constant 0 : index
    %c0_3 = arith.constant 0 : index
    %2 = vector.load %arg3[%c0_2, %c0_3] : memref<32x96xf32, #tpu.memory_space<vmem>>, vector<32x96xf32>
    %cst = arith.constant dense<0.000000e+00> : vector<8x96xf32>
    %3 = tpu.matmul %1, %2, %cst {dimension_numbers = #tpu.dot_dimension_numbers<[1], [0], [0], [1], [0, 0, 1, 1], [], []>} : vector<8x32xf32>, vector<32x96xf32>, vector<8x96xf32> -> vector<8x96xf32>
    %c0_4 = arith.constant 0 : index
    %c0_5 = arith.constant 0 : index
    %4 = vector.load %arg4[%c0_4, %c0_5] : memref<1x96xf32, #tpu.memory_space<vmem>>, vector<1x96xf32>
    %5 = vector.broadcast %4 : vector<1x96xf32> to vector<8x96xf32>
    %6 = arith.addf %3, %5 : vector<8x96xf32>
    %c0_6 = arith.constant 0 : index
    %c0_7 = arith.constant 0 : index
    %c0_8 = arith.constant 0 : index
    %7 = vector.load %arg5[%c0_6, %c0_7, %c0_8] : memref<1x8x96xf32, #tpu.memory_space<vmem>>, vector<1x8x96xf32>
    %8 = vector.shape_cast %7 : vector<1x8x96xf32> to vector<8x96xf32>
    %9 = vector.shape_cast %6 : vector<8x96xf32> to vector<1x8x96xf32>
    tpu.vector_store %arg5[%c0_6, %c0_7, %c0_8], %9 {strides = array<i32>} : memref<1x8x96xf32, #tpu.memory_space<vmem>>, vector<1x8x96xf32>,
    return
  }
  func.func @transform_0(%arg0: i32, %arg1: i32) -> (i32, i32, i32) {
    %c0_i32 = arith.constant 0 : i32
    %c0_i32_0 = arith.constant 0 : i32
    return %arg0, %arg1, %c0_i32 : i32, i32, i32
  }
  func.func @transform_1(%arg0: i32, %arg1: i32) -> (i32, i32) {
    %c0_i32 = arith.constant 0 : i32
    %c0_i32_0 = arith.constant 0 : i32
    %c0_i32_1 = arith.constant 0 : i32
    return %c0_i32, %c0_i32_0 : i32, i32
  }
  func.func @transform_2(%arg0: i32, %arg1: i32) -> (i32, i32) {
    %c0_i32 = arith.constant 0 : i32
    %c0_i32_0 = arith.constant 0 : i32
    %c0_i32_1 = arith.constant 0 : i32
    return %c0_i32, %c0_i32_0 : i32, i32
  }
  func.func @transform_3(%arg0: i32, %arg1: i32) -> (i32, i32, i32) {
    %c0_i32 = arith.constant 0 : i32
    %c0_i32_0 = arith.constant 0 : i32
    return %arg0, %arg1, %c0_i32 : i32, i32, i32
  }
}

</mosaic_0001>

<llo_original>
// kernel: tpu_custom_call.1
$region0: #{tpu_custom_call.1}
  #allocation0 [shape = 'u32[]', space=smem, size = 0x4, offset = 0x4, fixed_abs, tag = 'smem constant byte address 0x4 - core index']
  #allocation1 [shape = 'u32[144,128]{1,0:T(1,128)}', space=vmem, size = 0x12000, scoped, tag = 'internal scratch']
  %s0 = inlined_call_operand.hbm [shape: f32[2,8,32], index: 0, kind: input, shape index: {}]
  %s1 = inlined_call_operand.hbm [shape: f32[32,96], index: 1, kind: input, shape index: {}]
  %s2 = inlined_call_operand.vmem [shape: f32[1,96], index: 2, kind: input, shape index: {}]
  %s3 = inlined_call_operand.hbm [shape: f32[2,8,96], index: 3, kind: output, shape index: {}]
  %s4 = sld [smem:[#allocation0]]
  $region53: #{tpu_custom_call.1} parent=0
    _
  %s6 = ssub.s32 1, %s4
  %s7 = scalar_select 0, %s6, %s4
  $region1: #{tpu_custom_call.1} parent=0
    #allocation2 [shape = 'u8[8192]{0}', space=vmem, size = 0x2000, scoped, tag = 'input window, operand 0']
    #allocation3 [shape = 's32[2]{0}', space=sflag, size = 0x8, scoped, tag = 'scoped memory for tpu_custom_call.1']
    #allocation4 [shape = 's32[2]{0}', space=sflag, size = 0x8, scoped, tag = 'scoped memory for tpu_custom_call.1']
    #allocation5 [shape = 'u8[16384]{0}', space=vmem, size = 0x4000, scoped, tag = 'input window, operand 1, single buffered']
    #allocation6 [shape = 's32[1]{0}', space=sflag, size = 0x4, scoped, tag = 'scoped memory for tpu_custom_call.1']
    #allocation7 [shape = 'u8[8192]{0}', space=vmem, size = 0x2000, scoped, tag = 'output window, operand 0']
    %8 = vsyncpa [#allocation3], 0
    %s9 = scalar_lea.sflag [#allocation3], 1
    %10 = vsyncpa %s9, 0
    %11 = vsyncpa [#allocation6], 0
    %12 = vsyncpa [#allocation4], 0
    %s13 = scalar_lea.sflag [#allocation4], 1
    %14 = vsyncpa %s13, 0
    loop: start=0, step=1, limit=4
    $region2: #{tpu_custom_call.1} parent=1 // loop_pre_header
      _
    $region3: #{tpu_custom_call.1} parent=1 // loop_header
      %s16 = sphi 0, %s20
      %p17 = scmp.ge.s32.totalorder %s16, 4
      %s23 = sphi 0, %s35
      %s24 = sphi 0, %s31
      %s25 = sphi 0, %s23
      %s26 = sphi 0, %s24
      %s27 = sphi 0, %s25
      %s28 = sphi 0, %s26
      %s40 = sphi 0, %s42
      %s43 = sphi 0, %s40
      %s44 = sphi 0, %s43
      %s60 = sphi 0, %s44
      %s64 = sphi 0, %s64
      %s66 = sphi 0, %s64
      %s67 = sphi 0, %s66
      %s81 = sphi 0, %s67
      %s85 = sphi 0, %s85
      %s87 = sphi 0, %s85
      %s88 = sphi 0, %s87
      %s102 = sphi 0, %s88
      %s110 = sphi 0, %s112
      %s113 = sphi 0, %s110
      %s114 = sphi 0, %s113
      %s130 = sphi 0, %s114
    $region4: #{tpu_custom_call.1} parent=1 // loop_header_branch
      %19 = sbr.rel (%p17) target = $region8
    $region5: #{tpu_custom_call.1} parent=1 // loop_body
      %s21 = ssub.s32 %s16, 1
      %s22 = ssub.s32 %s16, 2
      %s29 = sadd.s32 1, %s24
      %p30 = scmp.ge.s32.totalorder %s29, 1
      %s31 = scalar_select %p30, 0, %s29
      %s32 = sadd.s32 1, %s23
      %s33 = scalar_select %p30, %s32, %s23
      %p34 = scmp.ge.s32.totalorder %s33, 2
      %s35 = scalar_select %p34, 0, %s33
      %s36 = ssub.s32 %s23, %s35
      %s37 = ssub.s32 %s24, %s31
      %s38 = sor.u32 %s36, %s37
      %p39 = scmp.eq.s32.totalorder %s38, 0
      %s41 = sadd.s32 %s40, 1
      %s42 = scalar_select %p39, %s40, %s41
      %p45 = pneg %p39
      %p46 = scmp.eq.s32.totalorder %s16, 1
      %p47 = por %p45, %p46
      %p48 = scmp.ne.s32.totalorder %s40, %s43
      %p49 = scmp.eq.s32.totalorder %s16, 0
      %p50 = por %p48, %p49
      %p51 = scmp.ne.s32.totalorder %s40, %s43
      %p52 = scmp.eq.s32.totalorder %s21, 1
      %p53 = por %p51, %p52
      %p54 = scmp.ne.s32.totalorder %s43, %s44
      %p55 = scmp.eq.s32.totalorder %s21, 0
      %p56 = por %p54, %p55
      %p57 = scmp.ne.s32.totalorder %s43, %s44
      %p58 = scmp.eq.s32.totalorder %s22, 1
      %p59 = por %p57, %p58
      %p61 = scmp.ne.s32.totalorder %s44, %s60
      %p62 = scmp.eq.s32.totalorder %s22, 0
      %p63 = por %p61, %p62
      %s65 = sadd.s32 %s64, 1
      %p68 = scmp.eq.s32.totalorder %s16, 1
      %p69 = scmp.ne.s32.totalorder %s64, %s66
      %p70 = scmp.eq.s32.totalorder %s16, 0
      %p71 = por %p69, %p70
      %p72 = scmp.ne.s32.totalorder %s64, %s66
      %p73 = scmp.eq.s32.totalorder %s21, 1
      %p74 = por %p72, %p73
      %p75 = scmp.ne.s32.totalorder %s66, %s67
      %p76 = scmp.eq.s32.totalorder %s21, 0
      %p77 = por %p75, %p76
      %p78 = scmp.ne.s32.totalorder %s66, %s67
      %p79 = scmp.eq.s32.totalorder %s22, 1
      %p80 = por %p78, %p79
      %p82 = scmp.ne.s32.totalorder %s67, %s81
      %p83 = scmp.eq.s32.totalorder %s22, 0
      %p84 = por %p82, %p83
      %s86 = sadd.s32 %s85, 1
      %p89 = scmp.eq.s32.totalorder %s16, 1
      %p90 = scmp.ne.s32.totalorder %s85, %s87
      %p91 = scmp.eq.s32.totalorder %s16, 0
      %p92 = por %p90, %p91
      %p93 = scmp.ne.s32.totalorder %s85, %s87
      %p94 = scmp.eq.s32.totalorder %s21, 1
      %p95 = por %p93, %p94
      %p96 = scmp.ne.s32.totalorder %s87, %s88
      %p97 = scmp.eq.s32.totalorder %s21, 0
      %p98 = por %p96, %p97
      %p99 = scmp.ne.s32.totalorder %s87, %s88
      %p100 = scmp.eq.s32.totalorder %s22, 1
      %p101 = por %p99, %p100
      %p103 = scmp.ne.s32.totalorder %s88, %s102
      %p104 = scmp.eq.s32.totalorder %s22, 0
      %p105 = por %p103, %p104
      %s106 = ssub.s32 %s23, %s35
      %s107 = ssub.s32 %s24, %s31
      %s108 = sor.u32 %s106, %s107
      %p109 = scmp.eq.s32.totalorder %s108, 0
      %s111 = sadd.s32 %s110, 1
      %s112 = scalar_select %p109, %s110, %s111
      %p115 = pneg %p109
      %p116 = scmp.eq.s32.totalorder %s16, 1
      %p117 = por %p115, %p116
      %p118 = scmp.ne.s32.totalorder %s110, %s113
      %p119 = scmp.eq.s32.totalorder %s16, 0
      %p120 = por %p118, %p119
      %p121 = scmp.ne.s32.totalorder %s110, %s113
      %p122 = scmp.eq.s32.totalorder %s21, 1
      %p123 = por %p121, %p122
      %p124 = scmp.ne.s32.totalorder %s113, %s114
      %p125 = scmp.eq.s32.totalorder %s21, 0
      %p126 = por %p124, %p125
      %p127 = scmp.ne.s32.totalorder %s113, %s114
      %p128 = scmp.eq.s32.totalorder %s22, 1
      %p129 = por %p127, %p128
      %p131 = scmp.ne.s32.totalorder %s114, %s130
      %p132 = scmp.eq.s32.totalorder %s22, 0
      %p133 = por %p131, %p132
      %p134 = scmp.le.s32.totalorder 1, %s16
      %p135 = scmp.lt.s32.totalorder %s16, 3
      %p136 = pnand %p134, %p135
      %p137 = pneg %p136
      // Predicated region
      $region9: #{tpu_custom_call.1} parent=5 // pred_check
        _
      $region10: #{tpu_custom_call.1} parent=5 // pred_check_branch
        %139 = sbr.rel (%p136) target = $region12
      $region11: #{tpu_custom_call.1} parent=5 // pred_region
        %s140 = ssub.s32 %s16, 1
        // Predicated region
        $region13: #{tpu_custom_call.1} parent=11 // pred_check
          %p141 = pneg %p77
        $region14: #{tpu_custom_call.1} parent=11 // pred_check_branch
          %143 = sbr.rel (%p141) target = $region16
        $region15: #{tpu_custom_call.1} parent=11 // pred_region
          %s145 = ssub.s32 512, 512
          %146 = vsyncadd [#allocation6], %s145
          %s147 = sshll.u32 [#allocation5], 4
          %s148 = int_to_ptr.vmem [resolvable:$true] %s147
          %153 = dma.hbm_to_vmem [thread:$0]  %s1, 512, %s148, [#allocation6], 128, 128, 8
        $region16: #{tpu_custom_call.1} parent=11 // pred_fallthru
          _
        // Predicated region
        $region17: #{tpu_custom_call.1} parent=11 // pred_check
          %p154 = pneg %p98
        $region18: #{tpu_custom_call.1} parent=11 // pred_check_branch
          %156 = sbr.rel (%p154) target = $region20
        $region19: #{tpu_custom_call.1} parent=11 // pred_region
          _
        $region20: #{tpu_custom_call.1} parent=11 // pred_fallthru
          _
      $region12: #{tpu_custom_call.1} parent=5 // pred_fallthru
        _
      %p157 = scmp.lt.s32.totalorder %s16, 2
      // Predicated region
      $region21: #{tpu_custom_call.1} parent=5 // pred_check
        %p158 = pneg %p157
      $region22: #{tpu_custom_call.1} parent=5 // pred_check_branch
        %160 = sbr.rel (%p158) target = $region24
      $region23: #{tpu_custom_call.1} parent=5 // pred_region
        // Predicated region
        $region25: #{tpu_custom_call.1} parent=23 // pred_check
          %p161 = pneg %p50
        $region26: #{tpu_custom_call.1} parent=23 // pred_check_branch
          %163 = sbr.rel (%p161) target = $region28
        $region27: #{tpu_custom_call.1} parent=23 // pred_region
          %s164 = sand.u32 %s40, 1
          %s165 = scalar_lea.sflag [#allocation3], %s164
          %s166 = sand.u32 %s40, 1
          %s167 = smul.addr %s166, 8
          %s168 = scalar_lea.vmem [#allocation2], %s167
          %s170 = ssub.s32 128, 128
          %171 = vsyncadd %s165, %s170
          %s172 = sadd.s32 %s24, %s23
          %s173 = smul.addr %s172, 128
          %s174 = scalar_lea.hbm %s0, %s173
          %s176 = sshll.u32 %s168, 4
          %s177 = int_to_ptr.vmem [resolvable:$true] %s176
          %179 = dma.hbm_to_vmem [thread:$0]  %s174, 128, %s177, %s165
        $region28: #{tpu_custom_call.1} parent=23 // pred_fallthru
          _
      $region24: #{tpu_custom_call.1} parent=5 // pred_fallthru
        _
      %p180 = scmp.le.s32.totalorder 1, %s16
      %p181 = scmp.lt.s32.totalorder %s16, 3
      %p182 = pnand %p180, %p181
      %p183 = pneg %p182
      // Predicated region
      $region29: #{tpu_custom_call.1} parent=5 // pred_check
        _
      $region30: #{tpu_custom_call.1} parent=5 // pred_check_branch
        %185 = sbr.rel (%p182) target = $region32
      $region31: #{tpu_custom_call.1} parent=5 // pred_region
        %s186 = ssub.s32 %s16, 1
        %s187 = sand.u32 %s43, 1
        %s188 = scalar_lea.sflag [#allocation3], %s187
        %s189 = sand.u32 %s43, 1
        %s190 = smul.addr %s189, 8
        %s191 = scalar_lea.vmem [#allocation2], %s190
        // Predicated region
        $region33: #{tpu_custom_call.1} parent=31 // pred_check
          %p192 = pneg %p56
        $region34: #{tpu_custom_call.1} parent=31 // pred_check_branch
          %194 = sbr.rel (%p192) target = $region36
        $region35: #{tpu_custom_call.1} parent=31 // pred_region
          %195 = dma.done %s188, 128
        $region36: #{tpu_custom_call.1} parent=31 // pred_fallthru
          _
        // Predicated region
        $region37: #{tpu_custom_call.1} parent=31 // pred_check
          %p196 = pneg %p77
        $region38: #{tpu_custom_call.1} parent=31 // pred_check_branch
          %198 = sbr.rel (%p196) target = $region40
        $region39: #{tpu_custom_call.1} parent=31 // pred_region
          %199 = dma.done [#allocation6], 512
        $region40: #{tpu_custom_call.1} parent=31 // pred_fallthru
          _
        %s200 = sand.u32 %s43, 1
        %s201 = scalar_lea.sflag [#allocation3], %s200
        %s202 = sand.u32 %s43, 1
        %s203 = smul.addr %s202, 8
        %s204 = scalar_lea.vmem [#allocation2], %s203
        %p205 = pneg %p56
        %p206 = pneg %p53
        %p207 = pneg %p77
        %p208 = pneg %p74
        %p209 = pneg %p98
        %p210 = pneg %p95
        %p211 = pneg %p126
        %p212 = pneg %p123
        %s213 = sand.u32 %s113, 1
        %s214 = scalar_lea.sflag [#allocation4], %s213
        %s215 = sand.u32 %s113, 1
        %s216 = smul.addr %s215, 8
        %s217 = scalar_lea.vmem [#allocation7], %s216
        %v218 = vld [vmem:[%s191] sm:$0xff]
        %v219 = vld [vmem:[#allocation5] sm:$0xff]
        %v220 = vld [vmem:[#allocation5 + $0x8] sm:$0xff]
        %v221 = vld [vmem:[#allocation5 + $0x10] sm:$0xff]
        %v222 = vld [vmem:[#allocation5 + $0x18] sm:$0xff]
        %v223 = vld [vmem:[%s2] sm:$0x1]
        %v225 = vlaneseq
        %v226 = vshrl.u32 %v225, 7
        %v227 = vsub.s32 0, %v226
        %v228 = vrot.slane %v223, %v227
        %vm230 = vcmask 261120
        %v232 = vsel %vm230, %v218, 0
        %234 = vmatprep.subr.mxu0 0.0
        %235 = vmatpush1.msra.mxu0 %v219
        %236 = vmatprep.subr.mxu0 0.0
        %237 = vmatpush1.msra.mxu0 %v220
        %238 = vmatprep.subr.mxu0 0.0
        %239 = vmatpush1.msra.mxu0 %v221
        %240 = vmatprep.subr.mxu0 0.0
        %241 = vmatpush1.msra.mxu0 %v222
        %242 = vmatprep.subr.mxu0 0.0
        %243 = vmatpush1.msra.mxu0 0.0
        %244 = vmatprep.subr.mxu0 0.0
        %245 = vmatpush1.msra.mxu0 0.0
        %246 = vmatprep.subr.mxu0 0.0
        %247 = vmatpush1.msra.mxu0 0.0
        %248 = vmatprep.subr.mxu0 0.0
        %249 = vmatpush1.msra.mxu0 0.0
        %250 = vmatprep.subr.mxu0 0.0
        %251 = vmatpush1.msra.mxu0 0.0
        %252 = vmatprep.subr.mxu0 0.0
        %253 = vmatpush1.msra.mxu0 0.0
        %254 = vmatprep.subr.mxu0 0.0
        %255 = vmatpush1.msra.mxu0 0.0
        %256 = vmatprep.subr.mxu0 0.0
        %257 = vmatpush1.msra.mxu0 0.0
        %258 = vmatprep.subr.mxu0 0.0
        %259 = vmatpush1.msra.mxu0 0.0
        %260 = vmatprep.subr.mxu0 0.0
        %261 = vmatpush1.msra.mxu0 0.0
        %262 = vmatprep.subr.mxu0 0.0
        %263 = vmatpush1.msra.mxu0 0.0
        %264 = vmatprep.subr.mxu0 0.0
        %265 = vmatpush1.msra.mxu0 0.0
        %266 = vmatprep.subr.mxu0 0.0
        %267 = vmatpush1.msra.mxu0 0.0
        %268 = vmatprep.subr.mxu0 0.0
        %269 = vmatpush1.msra.mxu0 0.0
        %270 = vmatprep.subr.mxu0 0.0
        %271 = vmatpush1.msra.mxu0 0.0
        %272 = vmatprep.subr.mxu0 0.0
        %273 = vmatpush1.msra.mxu0 0.0
        %274 = vmatprep.subr.mxu0 0.0
        %275 = vmatpush1.msra.mxu0 0.0
        %276 = vmatprep.subr.mxu0 0.0
        %277 = vmatpush1.msra.mxu0 0.0
        %278 = vmatprep.subr.mxu0 0.0
        %279 = vmatpush1.msra.mxu0 0.0
        %280 = vmatprep.subr.mxu0 0.0
        %281 = vmatpush1.msra.mxu0 0.0
        %282 = vmatprep.subr.mxu0 0.0
        %283 = vmatpush1.msra.mxu0 0.0
        %284 = vmatprep.subr.mxu0 0.0
        %285 = vmatpush1.msra.mxu0 0.0
        %286 = vmatprep.subr.mxu0 0.0
        %287 = vmatpush1.msra.mxu0 0.0
        %288 = vmatprep.subr.mxu0 0.0
        %289 = vmatpush1.msra.mxu0 0.0
        %290 = vmatprep.subr.mxu0 0.0
        %291 = vmatpush1.msra.mxu0 0.0
        %292 = vmatprep.subr.mxu0 0.0
        %293 = vmatpush1.msra.mxu0 0.0
        %294 = vmatprep.subr.mxu0 0.0
        %295 = vmatpush1.msra.mxu0 0.0
        %296 = vmatprep.subr.mxu0 0.0
        %297 = vmatpush1.msra.mxu0 0.0
        %298 = vmatprep.mubr.f32.mxu0 0.0
        %299 = vmatmul.mubr.f32.gmra.mrb[0].mxu0 %v232
        %v300 = vpop.f32.mrb[0].mxu0
        %v301 = vadd.f32 %v228, %v300
        %v302 = vpop.f32.mrb[0].mxu0
        %303 = vdwg.mxu0
        %vm304 = vcmask 785408
        %305 = vst.msk [vmem:[%s217] sm:$0xff] %vm304, %v301
        %s306 = sand.u32 %s113, 1
        %s307 = scalar_lea.sflag [#allocation4], %s306
        %s308 = sand.u32 %s113, 1
        %s309 = smul.addr %s308, 8
        %s310 = scalar_lea.vmem [#allocation7], %s309
        // Predicated region
        $region41: #{tpu_custom_call.1} parent=31 // pred_check
          %p311 = pneg %p123
        $region42: #{tpu_custom_call.1} parent=31 // pred_check_branch
          %313 = sbr.rel (%p311) target = $region44
        $region43: #{tpu_custom_call.1} parent=31 // pred_region
          %s315 = ssub.s32 128, 128
          %316 = vsyncadd %s307, %s315
          %s317 = sadd.s32 %s26, %s25
          %s318 = smul.addr %s317, 128
          %s319 = scalar_lea.hbm %s3, %s318
          %s321 = sshll.u32 %s310, 4
          %s322 = int_to_ptr.vmem [resolvable:$true] %s321
          %324 = dma.vmem_to_hbm [thread:$0]  %s322, 128, %s319, %s307
        $region44: #{tpu_custom_call.1} parent=31 // pred_fallthru
          _
      $region32: #{tpu_custom_call.1} parent=5 // pred_fallthru
        _
      %p325 = scmp.le.s32.totalorder 2, %s16
      // Predicated region
      $region45: #{tpu_custom_call.1} parent=5 // pred_check
        %p326 = pneg %p325
      $region46: #{tpu_custom_call.1} parent=5 // pred_check_branch
        %328 = sbr.rel (%p326) target = $region48
      $region47: #{tpu_custom_call.1} parent=5 // pred_region
        %s329 = ssub.s32 %s16, 2
        // Predicated region
        $region49: #{tpu_custom_call.1} parent=47 // pred_check
          %p330 = pneg %p129
        $region50: #{tpu_custom_call.1} parent=47 // pred_check_branch
          %332 = sbr.rel (%p330) target = $region52
        $region51: #{tpu_custom_call.1} parent=47 // pred_region
          %s333 = sand.u32 %s114, 1
          %s334 = scalar_lea.sflag [#allocation4], %s333
          %s335 = sand.u32 %s114, 1
          %s336 = smul.addr %s335, 8
          %s337 = scalar_lea.vmem [#allocation7], %s336
          %338 = dma.done %s334, 128
        $region52: #{tpu_custom_call.1} parent=47 // pred_fallthru
          _
      $region48: #{tpu_custom_call.1} parent=5 // pred_fallthru
        _
    $region6: #{tpu_custom_call.1} parent=1 // loop_footer
      %s20 = sadd.s32 1, %s16
    $region7: #{tpu_custom_call.1} parent=1 // loop_footer_branch
      %15 = sbr.rel target = $region3
    $region8: #{tpu_custom_call.1} parent=1 // loop_exit
      _
    %339 = vsyncpa [#allocation3], 1
    %s340 = scalar_lea.sflag [#allocation3], 1
    %341 = vsyncpa %s340, 1
    %342 = vsyncpa [#allocation6], 1
    %343 = vsyncpa [#allocation4], 1
    %s344 = scalar_lea.sflag [#allocation4], 1
    %345 = vsyncpa %s344, 1

</llo_original>
